<compile_context>
chip_gen: v6e
topology: v6e:2x2x1
jax: 0.10.0
libtpu: 0.0.40
codegen_flags: <defaults>
</compile_context>

<pallas_src>
import functools

import jax
import jax.numpy as jnp
import numpy as np
from jax.experimental import pallas as pl
from jax.experimental.pallas import tpu as pltpu


def _round_up(x, m):
    return ((x + m - 1) // m) * m


def _fused_mlp_kernel(x_ref, w_ref, b_ref, o_ref, *, n_layers: int):
    """Whole-MLP kernel.

    x_ref: (B_pad, Dp) f32   -- zero-padded input
    w_ref: (L, Dp, Dp) f32   -- pre-transposed (in_f, out_f), zero-padded
    b_ref: (L, 1, Dp)  f32   -- zero-padded biases
    o_ref: (B_pad, Dp) f32
    ReLU after every layer except the last (matches MLP.forward).
    """
    h = x_ref[...]                                       # (B_pad, Dp) f32
    for i in range(n_layers):                            # small, fully unrolled
        w = w_ref[i]                                     # (Dp, Dp), static index
        b = b_ref[i]                                     # (1, Dp)
        h = jnp.dot(h, w, preferred_element_type=jnp.float32) + b
        if i < n_layers - 1:
            h = jnp.maximum(h, 0.0)                      # f32 elementwise
    o_ref[...] = h.astype(o_ref.dtype)


def prepare_mlp_params(params):
    """One-time prep: transpose, zero-pad to a common (Dp, Dp) tile, stack.

    params: list of (w, b) with w PyTorch-style (out_f, in_f), b (out_f,).
    Returns (w_stack (L,Dp,Dp), b_stack (L,1,Dp), out_f_last).
    """
    dims = [params[0][0].shape[1]] + [w.shape[0] for (w, _) in params]
    Dp = max(_round_up(d, 128) for d in dims)            # lane-dense common dim
    w_list, b_list = [], []
    for (w, b) in params:
        out_f, in_f = w.shape
        wt = jnp.pad(jnp.asarray(w, jnp.float32).T,      # (in_f, out_f)
                     ((0, Dp - in_f), (0, Dp - out_f)))
        bp = jnp.pad(jnp.asarray(b, jnp.float32).reshape(1, -1),
                     ((0, 0), (0, Dp - out_f)))
        w_list.append(wt)
        b_list.append(bp)
    w_stack = jnp.stack(w_list)                          # (L, Dp, Dp)
    b_stack = jnp.stack(b_list)                          # (L, 1, Dp)
    # TODO(synk): cast stacks to bf16 on v6e/v7x (keep f32 accumulation).
    return w_stack, b_stack, dims[-1]


@functools.partial(jax.jit, static_argnames=("out_f",))
def mlp_forward(x, w_stack, b_stack, *, out_f):
    """Fused MLP forward. x: (B, in_f). Returns (B, out_f)."""
    B, in_f = x.shape
    L, Dp, _ = w_stack.shape
    B_pad = _round_up(max(B, 8), 8)                      # sublane-dense batch

    x_p = jnp.pad(x.astype(jnp.float32),
                  ((0, B_pad - B), (0, Dp - in_f)))      # single pad op

    kernel = functools.partial(_fused_mlp_kernel, n_layers=L)
    y_pad = pl.pallas_call(
        kernel,
        out_shape=jax.ShapeDtypeStruct((B_pad, Dp), jnp.float32),
        in_specs=[pl.BlockSpec(memory_space=pltpu.MemorySpace.VMEM)] * 3,
        out_specs=pl.BlockSpec(memory_space=pltpu.MemorySpace.VMEM),
    )(x_p, w_stack, b_stack)

    return y_pad[:B, :out_f].astype(x.dtype)


def init_mlp_params(key, layerdims, init_scale=None, bias_bool=True):
    """Parameter construction matching MLP.__init__ shapes/init."""
    params = []
    n_layers = len(layerdims) - 1
    keys = jax.random.split(key, n_layers)
    for l in range(n_layers):
        in_f, out_f = layerdims[l], layerdims[l + 1]
        if init_scale is not None:
            std = init_scale / np.sqrt(in_f)
            w = std * jax.random.normal(keys[l], (out_f, in_f), dtype=jnp.float32)
            b = jnp.zeros((out_f,), dtype=jnp.float32)
        else:
            # nn.Linear default: U(-1/sqrt(in_f), 1/sqrt(in_f)) for W and b.
            bound = 1.0 / np.sqrt(in_f)
            kw, kb = jax.random.split(keys[l])
            w = jax.random.uniform(kw, (out_f, in_f), dtype=jnp.float32,
                                   minval=-bound, maxval=bound)
            b = jax.random.uniform(kb, (out_f,), dtype=jnp.float32,
                                   minval=-bound, maxval=bound) if bias_bool \
                else jnp.zeros((out_f,), dtype=jnp.float32)
        if not bias_bool:
            b = jnp.zeros((out_f,), dtype=jnp.float32)
        params.append((w, b))
    return params


if __name__ == "__main__":
    key = jax.random.PRNGKey(0)
    kx, kp = jax.random.split(key)

    layerdims = [32, 64, 64, 16]
    batch = 8

    x = jax.random.normal(kx, (batch, layerdims[0]), dtype=jnp.float32)
    params = init_mlp_params(kp, layerdims, init_scale=1.0, bias_bool=True)

    # One-time prep (hoisted out of the per-call path).
    w_stack, b_stack, out_f = prepare_mlp_params(params)
    w_stack = jax.block_until_ready(w_stack)
    b_stack = jax.block_until_ready(b_stack)

    y = mlp_forward(x, w_stack, b_stack, out_f=out_f)
    y = jax.block_until_ready(y)

    # Reference check in plain JAX (same semantics as the PyTorch forward).
    ref = x
    for i, (w, b) in enumerate(params):
        ref = ref @ w.T + b
        if i < len(params) - 1:
            ref = jnp.maximum(ref, 0.0)
    np.testing.assert_allclose(np.asarray(y), np.asarray(ref), rtol=1e-5, atol=1e-5)

    assert y.shape == (batch, layerdims[-1])
    print("KERNEL_OK")
</pallas_src>

<mosaic_0001>
module attributes {stable_mosaic.version = 11 : i64} {
  func.func @_fused_mlp_kernel(%arg0: memref<8x128xf32, #tpu.memory_space<vmem>>, %arg1: memref<3x128x128xf32, #tpu.memory_space<vmem>>, %arg2: memref<3x1x128xf32, #tpu.memory_space<vmem>>, %arg3: memref<8x128xf32, #tpu.memory_space<vmem>>) attributes {dimension_semantics = [], scalar_prefetch = 0 : i64, scratch_operands = 0 : i64, tpu.core_type = #tpu.core_type<tc>} {
    %c0 = arith.constant 0 : index
    %c0_0 = arith.constant 0 : index
    %0 = vector.load %arg0[%c0, %c0_0] : memref<8x128xf32, #tpu.memory_space<vmem>>, vector<8x128xf32>
    %c0_1 = arith.constant 0 : index
    %c0_2 = arith.constant 0 : index
    %c0_3 = arith.constant 0 : index
    %1 = vector.load %arg1[%c0_1, %c0_2, %c0_3] : memref<3x128x128xf32, #tpu.memory_space<vmem>>, vector<1x128x128xf32>
    %2 = vector.shape_cast %1 : vector<1x128x128xf32> to vector<128x128xf32>
    %c0_4 = arith.constant 0 : index
    %c0_5 = arith.constant 0 : index
    %c0_6 = arith.constant 0 : index
    %3 = vector.load %arg2[%c0_4, %c0_5, %c0_6] : memref<3x1x128xf32, #tpu.memory_space<vmem>>, vector<1x1x128xf32>
    %4 = vector.shape_cast %3 : vector<1x1x128xf32> to vector<1x128xf32>
    %cst = arith.constant dense<0.000000e+00> : vector<8x128xf32>
    %5 = tpu.matmul %0, %2, %cst {dimension_numbers = #tpu.dot_dimension_numbers<[1], [0], [0], [1], [0, 0, 1, 1], [], []>} : vector<8x128xf32>, vector<128x128xf32>, vector<8x128xf32> -> vector<8x128xf32>
    %6 = vector.broadcast %4 : vector<1x128xf32> to vector<8x128xf32>
    %7 = arith.addf %5, %6 : vector<8x128xf32>
    %cst_7 = arith.constant 0.000000e+00 : f32
    %8 = vector.broadcast %cst_7 : f32 to vector<8x128xf32>
    %9 = arith.maximumf %7, %8 : vector<8x128xf32>
    %c1 = arith.constant 1 : index
    %c0_8 = arith.constant 0 : index
    %c0_9 = arith.constant 0 : index
    %10 = vector.load %arg1[%c1, %c0_8, %c0_9] : memref<3x128x128xf32, #tpu.memory_space<vmem>>, vector<1x128x128xf32>
    %11 = vector.shape_cast %10 : vector<1x128x128xf32> to vector<128x128xf32>
    %c1_10 = arith.constant 1 : index
    %c0_11 = arith.constant 0 : index
    %c0_12 = arith.constant 0 : index
    %12 = vector.load %arg2[%c1_10, %c0_11, %c0_12] : memref<3x1x128xf32, #tpu.memory_space<vmem>>, vector<1x1x128xf32>
    %13 = vector.shape_cast %12 : vector<1x1x128xf32> to vector<1x128xf32>
    %cst_13 = arith.constant dense<0.000000e+00> : vector<8x128xf32>
    %14 = tpu.matmul %9, %11, %cst_13 {dimension_numbers = #tpu.dot_dimension_numbers<[1], [0], [0], [1], [0, 0, 1, 1], [], []>} : vector<8x128xf32>, vector<128x128xf32>, vector<8x128xf32> -> vector<8x128xf32>
    %15 = vector.broadcast %13 : vector<1x128xf32> to vector<8x128xf32>
    %16 = arith.addf %14, %15 : vector<8x128xf32>
    %cst_14 = arith.constant 0.000000e+00 : f32
    %17 = vector.broadcast %cst_14 : f32 to vector<8x128xf32>
    %18 = arith.maximumf %16, %17 : vector<8x128xf32>
    %c2 = arith.constant 2 : index
    %c0_15 = arith.constant 0 : index
    %c0_16 = arith.constant 0 : index
    %19 = vector.load %arg1[%c2, %c0_15, %c0_16] : memref<3x128x128xf32, #tpu.memory_space<vmem>>, vector<1x128x128xf32>
    %20 = vector.shape_cast %19 : vector<1x128x128xf32> to vector<128x128xf32>
    %c2_17 = arith.constant 2 : index
    %c0_18 = arith.constant 0 : index
    %c0_19 = arith.constant 0 : index
    %21 = vector.load %arg2[%c2_17, %c0_18, %c0_19] : memref<3x1x128xf32, #tpu.memory_space<vmem>>, vector<1x1x128xf32>
    %22 = vector.shape_cast %21 : vector<1x1x128xf32> to vector<1x128xf32>
    %cst_20 = arith.constant dense<0.000000e+00> : vector<8x128xf32>
    %23 = tpu.matmul %18, %20, %cst_20 {dimension_numbers = #tpu.dot_dimension_numbers<[1], [0], [0], [1], [0, 0, 1, 1], [], []>} : vector<8x128xf32>, vector<128x128xf32>, vector<8x128xf32> -> vector<8x128xf32>
    %24 = vector.broadcast %22 : vector<1x128xf32> to vector<8x128xf32>
    %25 = arith.addf %23, %24 : vector<8x128xf32>
    %c0_21 = arith.constant 0 : index
    %c0_22 = arith.constant 0 : index
    %26 = vector.load %arg3[%c0_21, %c0_22] : memref<8x128xf32, #tpu.memory_space<vmem>>, vector<8x128xf32>
    tpu.vector_store %arg3[%c0_21, %c0_22], %25 {strides = array<i32>} : memref<8x128xf32, #tpu.memory_space<vmem>>, vector<8x128xf32>,
    return
  }
}

</mosaic_0001>

<llo_original>
// kernel: mlp_forward.1
$region0: #{mlp_forward.1}
  #allocation0 [shape = 'u32[]', space=smem, size = 0x4, offset = 0x4, fixed_abs, tag = 'smem constant byte address 0x4 - core index']
  #allocation1 [shape = 'u32[144,128]{1,0:T(1,128)}', space=vmem, size = 0x12000, scoped, tag = 'internal scratch']
  %s0 = inlined_call_operand.vmem [shape: f32[8,128], index: 0, kind: input, shape index: {}]
  %s1 = inlined_call_operand.hbm [shape: f32[3,128,128], index: 1, kind: input, shape index: {}]
  %s2 = inlined_call_operand.vmem [shape: f32[3,1,128], index: 2, kind: input, shape index: {}]
  %s3 = inlined_call_operand.hbm [shape: f32[8,128], index: 3, kind: output, shape index: {}]
  %s4 = sld [smem:[#allocation0]]
  $region26: #{mlp_forward.1} parent=0
    _
  %s6 = ssub.s32 1, %s4
  %s7 = scalar_select 0, %s6, %s4
  $region1: #{mlp_forward.1} parent=0
    #allocation2 [shape = 'u8[196608]{0}', space=vmem, size = 0x30000, scoped, tag = 'input window, operand 1, single buffered']
    #allocation3 [shape = 's32[1]{0}', space=sflag, size = 0x4, scoped, tag = 'scoped memory for mlp_forward.1']
    #allocation4 [shape = 's32[1]{0}', space=sflag, size = 0x4, scoped, tag = 'scoped memory for mlp_forward.1']
    #allocation5 [shape = 'u8[4096]{0}', space=vmem, size = 0x1000, scoped, tag = 'output window, operand 0, single buffered']
    %8 = vsyncpa [#allocation3], 0
    %9 = vsyncpa [#allocation4], 0
    // Predicated region
    $region2: #{mlp_forward.1} parent=1 // pred_check
      _
    $region3: #{mlp_forward.1} parent=1 // pred_check_branch
      %11 = sbr.rel (0) target = $region5
    $region4: #{mlp_forward.1} parent=1 // pred_region
      _
    $region5: #{mlp_forward.1} parent=1 // pred_fallthru
      _
    // Predicated region
    $region6: #{mlp_forward.1} parent=1 // pred_check
      _
    $region7: #{mlp_forward.1} parent=1 // pred_check_branch
      %13 = sbr.rel (0) target = $region9
    $region8: #{mlp_forward.1} parent=1 // pred_region
      %s15 = ssub.s32 6144, 6144
      %16 = vsyncadd [#allocation3], %s15
      %s17 = sshll.u32 [#allocation2], 4
      %s18 = int_to_ptr.vmem [resolvable:$true] %s17
      %23 = dma.hbm_to_vmem [thread:$0]  %s1, 6144, %s18, [#allocation3], 128, 128, 8
    $region9: #{mlp_forward.1} parent=1 // pred_fallthru
      _
    // Predicated region
    $region10: #{mlp_forward.1} parent=1 // pred_check
      _
    $region11: #{mlp_forward.1} parent=1 // pred_check_branch
      %25 = sbr.rel (0) target = $region13
    $region12: #{mlp_forward.1} parent=1 // pred_region
      _
    $region13: #{mlp_forward.1} parent=1 // pred_fallthru
      _
    // Predicated region
    $region14: #{mlp_forward.1} parent=1 // pred_check
      _
    $region15: #{mlp_forward.1} parent=1 // pred_check_branch
      %27 = sbr.rel (0) target = $region17
    $region16: #{mlp_forward.1} parent=1 // pred_region
      %28 = dma.done [#allocation3], 6144
    $region17: #{mlp_forward.1} parent=1 // pred_fallthru
      _
    %v29 = vld [vmem:[%s0] sm:$0xff]
    %v30 = vld [vmem:[#allocation2] sm:$0xff]
    %v31 = vld [vmem:[#allocation2 + $0x8] sm:$0xff]
    %v32 = vld [vmem:[#allocation2 + $0x10] sm:$0xff]
    %v33 = vld [vmem:[#allocation2 + $0x18] sm:$0xff]
    %v34 = vld [vmem:[#allocation2 + $0x20] sm:$0xff]
    %v35 = vld [vmem:[#allocation2 + $0x28] sm:$0xff]
    %v36 = vld [vmem:[#allocation2 + $0x30] sm:$0xff]
    %v37 = vld [vmem:[#allocation2 + $0x38] sm:$0xff]
    %v38 = vld [vmem:[#allocation2 + $0x40] sm:$0xff]
    %v39 = vld [vmem:[#allocation2 + $0x48] sm:$0xff]
    %v40 = vld [vmem:[#allocation2 + $0x50] sm:$0xff]
    %v41 = vld [vmem:[#allocation2 + $0x58] sm:$0xff]
    %v42 = vld [vmem:[#allocation2 + $0x60] sm:$0xff]
    %v43 = vld [vmem:[#allocation2 + $0x68] sm:$0xff]
    %v44 = vld [vmem:[#allocation2 + $0x70] sm:$0xff]
    %v45 = vld [vmem:[#allocation2 + $0x78] sm:$0xff]
    %v46 = vld [vmem:[%s2] sm:$0x1]
    %v48 = vlaneseq
    %v49 = vshrl.u32 %v48, 7
    %v50 = vsub.s32 0, %v49
    %v51 = vrot.slane %v46, %v50
    %53 = vmatprep.subr.mxu0 0.0
    %54 = vmatpush1.msra.mxu0 %v45
    %55 = vmatprep.subr.mxu0 0.0
    %56 = vmatpush1.msra.mxu0 %v44
    %57 = vmatprep.subr.mxu0 0.0
    %58 = vmatpush1.msra.mxu0 %v43
    %59 = vmatprep.subr.mxu0 0.0
    %60 = vmatpush1.msra.mxu0 %v42
    %61 = vmatprep.subr.mxu0 0.0
    %62 = vmatpush1.msra.mxu0 %v41
    %63 = vmatprep.subr.mxu0 0.0
    %64 = vmatpush1.msra.mxu0 %v40
    %65 = vmatprep.subr.mxu0 0.0
    %66 = vmatpush1.msra.mxu0 %v39
    %67 = vmatprep.subr.mxu0 0.0
    %68 = vmatpush1.msra.mxu0 %v38
    %69 = vmatprep.subr.mxu0 0.0
    %70 = vmatpush1.msra.mxu0 %v37
    %71 = vmatprep.subr.mxu0 0.0
    %72 = vmatpush1.msra.mxu0 %v36
    %73 = vmatprep.subr.mxu0 0.0
    %74 = vmatpush1.msra.mxu0 %v35
    %75 = vmatprep.subr.mxu0 0.0
    %76 = vmatpush1.msra.mxu0 %v34
    %77 = vmatprep.subr.mxu0 0.0
    %78 = vmatpush1.msra.mxu0 %v33
    %79 = vmatprep.subr.mxu0 0.0
    %80 = vmatpush1.msra.mxu0 %v32
    %81 = vmatprep.subr.mxu0 0.0
    %82 = vmatpush1.msra.mxu0 %v31
    %83 = vmatprep.subr.mxu0 0.0
    %84 = vmatpush1.msra.mxu0 %v30
    %85 = vmatprep.subr.mxu0 0.0
    %86 = vmatpush2.msra.mxu0 0.0
    %87 = vmatprep.subr.mxu0 0.0
    %88 = vmatpush2.msra.mxu0 0.0
    %89 = vmatprep.subr.mxu0 0.0
    %90 = vmatpush2.msra.mxu0 0.0
    %91 = vmatprep.subr.mxu0 0.0
    %92 = vmatpush2.msra.mxu0 0.0
    %93 = vmatprep.subr.mxu0 0.0
    %94 = vmatpush2.msra.mxu0 0.0
    %95 = vmatprep.subr.mxu0 0.0
    %96 = vmatpush2.msra.mxu0 0.0
    %97 = vmatprep.subr.mxu0 0.0
    %98 = vmatpush2.msra.mxu0 0.0
    %99 = vmatprep.subr.mxu0 0.0
    %100 = vmatpush2.msra.mxu0 0.0
    %101 = vmatprep.subr.mxu0 0.0
    %102 = vmatpush2.msra.mxu0 0.0
    %103 = vmatprep.subr.mxu0 0.0
    %104 = vmatpush2.msra.mxu0 0.0
    %105 = vmatprep.subr.mxu0 0.0
    %106 = vmatpush2.msra.mxu0 0.0
    %107 = vmatprep.subr.mxu0 0.0
    %108 = vmatpush2.msra.mxu0 0.0
    %109 = vmatprep.subr.mxu0 0.0
    %110 = vmatpush2.msra.mxu0 0.0
    %111 = vmatprep.subr.mxu0 0.0
    %112 = vmatpush2.msra.mxu0 0.0
    %113 = vmatprep.subr.mxu0 0.0
    %114 = vmatpush2.msra.mxu0 0.0
    %115 = vmatprep.subr.mxu0 0.0
    %116 = vmatpush2.msra.mxu0 0.0
    %117 = vmatprep.mubr.f32.mxu0 0.0
    %118 = vmatmul.mubr.f32.gmra.mxu0 %v29
    %v119 = vpop.f32.mrf.mxu0
    %v120 = vadd.f32 %v51, %v119
    %v121 = vpop.f32.mrf.mxu0
    %122 = vdwg.mxu0
    %v123 = vmax.f32 %v120, 0.0
    %s124 = scalar_lea.vmem [#allocation2], 128
    %v125 = vld [vmem:[%s124] sm:$0xff]
    %v126 = vld [vmem:[%s124 + $0x8] sm:$0xff]
    %v127 = vld [vmem:[%s124 + $0x10] sm:$0xff]
    %v128 = vld [vmem:[%s124 + $0x18] sm:$0xff]
    %v129 = vld [vmem:[%s124 + $0x20] sm:$0xff]
    %v130 = vld [vmem:[%s124 + $0x28] sm:$0xff]
    %v131 = vld [vmem:[%s124 + $0x30] sm:$0xff]
    %v132 = vld [vmem:[%s124 + $0x38] sm:$0xff]
    %v133 = vld [vmem:[%s124 + $0x40] sm:$0xff]
    %v134 = vld [vmem:[%s124 + $0x48] sm:$0xff]
    %v135 = vld [vmem:[%s124 + $0x50] sm:$0xff]
    %v136 = vld [vmem:[%s124 + $0x58] sm:$0xff]
    %v137 = vld [vmem:[%s124 + $0x60] sm:$0xff]
    %v138 = vld [vmem:[%s124 + $0x68] sm:$0xff]
    %v139 = vld [vmem:[%s124 + $0x70] sm:$0xff]
    %v140 = vld [vmem:[%s124 + $0x78] sm:$0xff]
    %s141 = scalar_lea.vmem %s2, 1
    %v142 = vld [vmem:[%s141] sm:$0x1]
    %v144 = vlaneseq
    %v145 = vshrl.u32 %v144, 7
    %v146 = vsub.s32 0, %v145
    %v147 = vrot.slane %v142, %v146
    %149 = vmatprep.subr.mxu0 0.0
    %150 = vmatpush1.msra.mxu0 %v140
    %151 = vmatprep.subr.mxu0 0.0
    %152 = vmatpush1.msra.mxu0 %v139
    %153 = vmatprep.subr.mxu0 0.0
    %154 = vmatpush1.msra.mxu0 %v138
    %155 = vmatprep.subr.mxu0 0.0
    %156 = vmatpush1.msra.mxu0 %v137
    %157 = vmatprep.subr.mxu0 0.0
    %158 = vmatpush1.msra.mxu0 %v136
    %159 = vmatprep.subr.mxu0 0.0
    %160 = vmatpush1.msra.mxu0 %v135
    %161 = vmatprep.subr.mxu0 0.0
    %162 = vmatpush1.msra.mxu0 %v134
    %163 = vmatprep.subr.mxu0 0.0
    %164 = vmatpush1.msra.mxu0 %v133
    %165 = vmatprep.subr.mxu0 0.0
    %166 = vmatpush1.msra.mxu0 %v132
    %167 = vmatprep.subr.mxu0 0.0
    %168 = vmatpush1.msra.mxu0 %v131
    %169 = vmatprep.subr.mxu0 0.0
    %170 = vmatpush1.msra.mxu0 %v130
    %171 = vmatprep.subr.mxu0 0.0
    %172 = vmatpush1.msra.mxu0 %v129
    %173 = vmatprep.subr.mxu0 0.0
    %174 = vmatpush1.msra.mxu0 %v128
    %175 = vmatprep.subr.mxu0 0.0
    %176 = vmatpush1.msra.mxu0 %v127
    %177 = vmatprep.subr.mxu0 0.0
    %178 = vmatpush1.msra.mxu0 %v126
    %179 = vmatprep.subr.mxu0 0.0
    %180 = vmatpush1.msra.mxu0 %v125
    %181 = vmatprep.subr.mxu0 0.0
    %182 = vmatpush2.msra.mxu0 0.0
    %183 = vmatprep.subr.mxu0 0.0
    %184 = vmatpush2.msra.mxu0 0.0
    %185 = vmatprep.subr.mxu0 0.0
    %186 = vmatpush2.msra.mxu0 0.0
    %187 = vmatprep.subr.mxu0 0.0
    %188 = vmatpush2.msra.mxu0 0.0
    %189 = vmatprep.subr.mxu0 0.0
    %190 = vmatpush2.msra.mxu0 0.0
    %191 = vmatprep.subr.mxu0 0.0
    %192 = vmatpush2.msra.mxu0 0.0
    %193 = vmatprep.subr.mxu0 0.0
    %194 = vmatpush2.msra.mxu0 0.0
    %195 = vmatprep.subr.mxu0 0.0
    %196 = vmatpush2.msra.mxu0 0.0
    %197 = vmatprep.subr.mxu0 0.0
    %198 = vmatpush2.msra.mxu0 0.0
    %199 = vmatprep.subr.mxu0 0.0
    %200 = vmatpush2.msra.mxu0 0.0
    %201 = vmatprep.subr.mxu0 0.0
    %202 = vmatpush2.msra.mxu0 0.0
    %203 = vmatprep.subr.mxu0 0.0
    %204 = vmatpush2.msra.mxu0 0.0
    %205 = vmatprep.subr.mxu0 0.0
    %206 = vmatpush2.msra.mxu0 0.0
    %207 = vmatprep.subr.mxu0 0.0
    %208 = vmatpush2.msra.mxu0 0.0
    %209 = vmatprep.subr.mxu0 0.0
    %210 = vmatpush2.msra.mxu0 0.0
    %211 = vmatprep.subr.mxu0 0.0
    %212 = vmatpush2.msra.mxu0 0.0
    %213 = vmatprep.mubr.f32.mxu0 0.0
    %214 = vmatmul.mubr.f32.gmra.mxu0 %v123
    %v215 = vpop.f32.mrf.mxu0
    %v216 = vadd.f32 %v147, %v215
    %v217 = vpop.f32.mrf.mxu0
    %218 = vdwg.mxu0
    %v219 = vmax.f32 %v216, 0.0
    %s220 = scalar_lea.vmem [#allocation2], 256
    %v221 = vld [vmem:[%s220] sm:$0xff]
    %v222 = vld [vmem:[%s220 + $0x8] sm:$0xff]
    %v223 = vld [vmem:[%s220 + $0x10] sm:$0xff]
    %v224 = vld [vmem:[%s220 + $0x18] sm:$0xff]
    %v225 = vld [vmem:[%s220 + $0x20] sm:$0xff]
    %v226 = vld [vmem:[%s220 + $0x28] sm:$0xff]
    %v227 = vld [vmem:[%s220 + $0x30] sm:$0xff]
    %v228 = vld [vmem:[%s220 + $0x38] sm:$0xff]
    %v229 = vld [vmem:[%s220 + $0x40] sm:$0xff]
    %v230 = vld [vmem:[%s220 + $0x48] sm:$0xff]
    %v231 = vld [vmem:[%s220 + $0x50] sm:$0xff]
    %v232 = vld [vmem:[%s220 + $0x58] sm:$0xff]
    %v233 = vld [vmem:[%s220 + $0x60] sm:$0xff]
    %v234 = vld [vmem:[%s220 + $0x68] sm:$0xff]
    %v235 = vld [vmem:[%s220 + $0x70] sm:$0xff]
    %v236 = vld [vmem:[%s220 + $0x78] sm:$0xff]
    %s237 = scalar_lea.vmem %s2, 2
    %v238 = vld [vmem:[%s237] sm:$0x1]
    %v240 = vlaneseq
    %v241 = vshrl.u32 %v240, 7
    %v242 = vsub.s32 0, %v241
    %v243 = vrot.slane %v238, %v242
    %245 = vmatprep.subr.mxu0 0.0
    %246 = vmatpush1.msra.mxu0 %v236
    %247 = vmatprep.subr.mxu0 0.0
    %248 = vmatpush1.msra.mxu0 %v235
    %249 = vmatprep.subr.mxu0 0.0
    %250 = vmatpush1.msra.mxu0 %v234
    %251 = vmatprep.subr.mxu0 0.0
    %252 = vmatpush1.msra.mxu0 %v233
    %253 = vmatprep.subr.mxu0 0.0
    %254 = vmatpush1.msra.mxu0 %v232
    %255 = vmatprep.subr.mxu0 0.0
    %256 = vmatpush1.msra.mxu0 %v231
    %257 = vmatprep.subr.mxu0 0.0
    %258 = vmatpush1.msra.mxu0 %v230
    %259 = vmatprep.subr.mxu0 0.0
    %260 = vmatpush1.msra.mxu0 %v229
    %261 = vmatprep.subr.mxu0 0.0
    %262 = vmatpush1.msra.mxu0 %v228
    %263 = vmatprep.subr.mxu0 0.0
    %264 = vmatpush1.msra.mxu0 %v227
    %265 = vmatprep.subr.mxu0 0.0
    %266 = vmatpush1.msra.mxu0 %v226
    %267 = vmatprep.subr.mxu0 0.0
    %268 = vmatpush1.msra.mxu0 %v225
    %269 = vmatprep.subr.mxu0 0.0
    %270 = vmatpush1.msra.mxu0 %v224
    %271 = vmatprep.subr.mxu0 0.0
    %272 = vmatpush1.msra.mxu0 %v223
    %273 = vmatprep.subr.mxu0 0.0
    %274 = vmatpush1.msra.mxu0 %v222
    %275 = vmatprep.subr.mxu0 0.0
    %276 = vmatpush1.msra.mxu0 %v221
    %277 = vmatprep.subr.mxu0 0.0
    %278 = vmatpush2.msra.mxu0 0.0
    %279 = vmatprep.subr.mxu0 0.0
    %280 = vmatpush2.msra.mxu0 0.0
    %281 = vmatprep.subr.mxu0 0.0
    %282 = vmatpush2.msra.mxu0 0.0
    %283 = vmatprep.subr.mxu0 0.0
    %284 = vmatpush2.msra.mxu0 0.0
    %285 = vmatprep.subr.mxu0 0.0
    %286 = vmatpush2.msra.mxu0 0.0
    %287 = vmatprep.subr.mxu0 0.0
    %288 = vmatpush2.msra.mxu0 0.0
    %289 = vmatprep.subr.mxu0 0.0
    %290 = vmatpush2.msra.mxu0 0.0
    %291 = vmatprep.subr.mxu0 0.0
    %292 = vmatpush2.msra.mxu0 0.0
    %293 = vmatprep.subr.mxu0 0.0
    %294 = vmatpush2.msra.mxu0 0.0
    %295 = vmatprep.subr.mxu0 0.0
    %296 = vmatpush2.msra.mxu0 0.0
    %297 = vmatprep.subr.mxu0 0.0
    %298 = vmatpush2.msra.mxu0 0.0
    %299 = vmatprep.subr.mxu0 0.0
    %300 = vmatpush2.msra.mxu0 0.0
    %301 = vmatprep.subr.mxu0 0.0
    %302 = vmatpush2.msra.mxu0 0.0
    %303 = vmatprep.subr.mxu0 0.0
    %304 = vmatpush2.msra.mxu0 0.0
    %305 = vmatprep.subr.mxu0 0.0
    %306 = vmatpush2.msra.mxu0 0.0
    %307 = vmatprep.subr.mxu0 0.0
    %308 = vmatpush2.msra.mxu0 0.0
    %309 = vmatprep.mubr.f32.mxu0 0.0
    %310 = vmatmul.mubr.f32.gmra.mxu0 %v219
    %v311 = vpop.f32.mrf.mxu0
    %v312 = vadd.f32 %v243, %v311
    %v313 = vpop.f32.mrf.mxu0
    %314 = vdwg.mxu0
    %315 = vst [vmem:[#allocation5] sm:$0xff] %v312
    // Predicated region
    $region18: #{mlp_forward.1} parent=1 // pred_check
      _
    $region19: #{mlp_forward.1} parent=1 // pred_check_branch
      %317 = sbr.rel (0) target = $region21
    $region20: #{mlp_forward.1} parent=1 // pred_region
      %s319 = ssub.s32 128, 128
      %320 = vsyncadd [#allocation4], %s319
      %s322 = sshll.u32 [#allocation5], 4
      %s323 = int_to_ptr.vmem [resolvable:$true] %s322
      %325 = dma.vmem_to_hbm [thread:$0]  %s323, 128, %s3, [#allocation4]
    $region21: #{mlp_forward.1} parent=1 // pred_fallthru
      _
    // Predicated region
    $region22: #{mlp_forward.1} parent=1 // pred_check
      _
    $region23: #{mlp_forward.1} parent=1 // pred_check_branch
      %327 = sbr.rel (0) target = $region25
    $region24: #{mlp_forward.1} parent=1 // pred_region
      %328 = dma.done [#allocation4], 128
    $region25: #{mlp_forward.1} parent=1 // pred_fallthru
      _
    %329 = vsyncpa [#allocation3], 1
    %330 = vsyncpa [#allocation4], 1

</llo_original>
